<compile_context>
chip_gen: v6e
topology: v6e:2x2x1
jax: 0.10.0
libtpu: 0.0.40
codegen_flags: <defaults>
</compile_context>

<pallas_src>
import jax
import jax.numpy as jnp
from jax.experimental import pallas as pl
from jax.experimental.pallas import tpu as pltpu


def _round_up(x, m):
    return (x + m - 1) // m * m


# ---------------------------------------------------------------------------
# Kernel 1: routing + expert mixing (tiny, single invocation, arrays in VMEM)
# ---------------------------------------------------------------------------
def _routing_mix_kernel(pooled_ref, wr_t_ref, br_ref, we_flat_ref, mixed_ref):
    # pooled_ref : (B_p, C_in_p)            f32  spatial mean of x (true HW)
    # wr_t_ref   : (C_in_p, E_p)            f32  routing weight, pre-transposed
    # br_ref     : (1, E_p)                 f32  routing bias
    # we_flat_ref: (E_p, C_out_p * C_in_p)  f32  experts, lane-dense flattened
    # mixed_ref  : (B_p, C_out_p * C_in_p)  bf16 per-sample mixed 1x1 weights
    logits = jnp.dot(pooled_ref[...], wr_t_ref[...],
                     preferred_element_type=jnp.float32) + br_ref[...]
    r = jax.nn.sigmoid(logits)                                    # (B_p, E_p)
    mixed = jnp.dot(r, we_flat_ref[...],
                    preferred_element_type=jnp.float32)           # (B_p, O*I)
    mixed_ref[...] = mixed.astype(mixed_ref.dtype)


# ---------------------------------------------------------------------------
# Kernel 2: 1x1 conv == per-sample channel matmul, tiled over (batch, HW)
# ---------------------------------------------------------------------------
def _conv1x1_kernel(mixed_ref, x_ref, o_ref):
    # mixed_ref: (Bt, C_out_p, C_in_p)  bf16   (constant over the HW axis)
    # x_ref    : (Bt, C_in_p, T_HW)     bf16
    # o_ref    : (Bt, C_out_p, T_HW)    f32
    out = jnp.einsum('boi,bit->bot', mixed_ref[...], x_ref[...],
                     preferred_element_type=jnp.float32)
    o_ref[...] = out.astype(o_ref.dtype)


def dynamic_conv(x, routing_w, routing_b, expert_w):
    """x: (B, C_in, H, W) f32.  routing_w: (E, C_in), routing_b: (E,),
    expert_w: (E, C_out, C_in).  Returns (B, C_out, H, W) f32."""
    B, C_in, H, W = x.shape
    E, C_out, _ = expert_w.shape
    HW = H * W

    # ---- padded sizes ----------------------------------------------------
    Bt = min(B, 8)                       # samples per grid step (amortize step overhead)
    B_p = _round_up(B, Bt)
    E_p = _round_up(E, 8)
    C_in_p = _round_up(C_in, 16)         # bf16 sublane packing
    C_out_p = _round_up(C_out, 8)
    HW_128 = _round_up(HW, 128)          # lane-dense loads/stores

    # HW tile: biggest multiple of 128 keeping double-buffered x(bf16)+out(f32)
    # tiles under ~32 MiB; cap at 2048 lanes.
    tile_budget = 32 * 1024 * 1024
    bytes_per_lane = 2 * Bt * (C_in_p * 2 + C_out_p * 4)
    t_hw = (tile_budget // bytes_per_lane) // 128 * 128
    t_hw = max(128, min(t_hw, 2048, HW_128))
    HW_p = _round_up(HW_128, t_hw)

    # ---- routing / expert-mix pass (f32 math, bf16 result) ----------------
    # Spatial mean from the UNPADDED tensor (correct divisor, no pad pollution).
    pooled = jnp.mean(x.astype(jnp.float32), axis=(2, 3))            # (B, C_in)
    pooled_p = jnp.pad(pooled, ((0, B_p - B), (0, C_in_p - C_in)))
    wr_t = jnp.pad(routing_w.astype(jnp.float32),
                   ((0, E_p - E), (0, C_in_p - C_in))).T             # (C_in_p, E_p)
    br_row = jnp.pad(routing_b.astype(jnp.float32),
                     (0, E_p - E)).reshape(1, E_p)
    we_flat = jnp.pad(expert_w.astype(jnp.float32),
                      ((0, E_p - E), (0, C_out_p - C_out), (0, C_in_p - C_in))
                      ).reshape(E_p, C_out_p * C_in_p)

    mixed_flat = pl.pallas_call(
        _routing_mix_kernel,
        out_shape=jax.ShapeDtypeStruct((B_p, C_out_p * C_in_p), jnp.bfloat16),
    )(pooled_p, wr_t, br_row, we_flat)
    mixed = mixed_flat.reshape(B_p, C_out_p, C_in_p)                 # bf16

    # ---- main 1x1 conv pass (bf16 data path, f32 accumulate) --------------
    x_p = jnp.pad(x.reshape(B, C_in, HW),
                  ((0, B_p - B), (0, C_in_p - C_in), (0, HW_p - HW))
                  ).astype(jnp.bfloat16)

    grid = (B_p // Bt, HW_p // t_hw)
    out = pl.pallas_call(
        _conv1x1_kernel,
        out_shape=jax.ShapeDtypeStruct((B_p, C_out_p, HW_p), jnp.float32),
        grid_spec=pltpu.PrefetchScalarGridSpec(
            num_scalar_prefetch=0,
            grid=grid,
            in_specs=[
                pl.BlockSpec((Bt, C_out_p, C_in_p), lambda b, t: (b, 0, 0)),
                pl.BlockSpec((Bt, C_in_p, t_hw), lambda b, t: (b, 0, t)),
            ],
            out_specs=pl.BlockSpec((Bt, C_out_p, t_hw), lambda b, t: (b, 0, t)),
        ),
        compiler_params=pltpu.CompilerParams(
            dimension_semantics=("parallel", "parallel"),
            vmem_limit_bytes=48 * 1024 * 1024),
    )(mixed, x_p)

    return out[:B, :C_out, :HW].reshape(B, C_out, H, W).astype(x.dtype)


def dynamic_conv_reference(x, routing_w, routing_b, expert_w):
    """Pure-JAX f32 reference mirroring the PyTorch forward (k=1, groups=1)."""
    pooled = x.mean(axis=(2, 3))                                     # (B, C_in)
    r = jax.nn.sigmoid(pooled @ routing_w.T + routing_b[None, :])    # (B, E)
    mixed = jnp.einsum('be,eoi->boi', r, expert_w)                   # (B, C_out, C_in)
    return jnp.einsum('boi,bihw->bohw', mixed, x)                    # (B, C_out, H, W)


if __name__ == "__main__":
    B, C_in, C_out, H, W, E = 2, 4, 8, 16, 16, 4

    key = jax.random.PRNGKey(0)
    kx, kwr, kbr, kwe = jax.random.split(key, 4)

    x = jax.random.normal(kx, (B, C_in, H, W), dtype=jnp.float32)
    # nn.Linear(in_features=C_in, out_features=E): weight (E, C_in), bias (E,)
    routing_w = 0.1 * jax.random.normal(kwr, (E, C_in), dtype=jnp.float32)
    routing_b = 0.1 * jax.random.normal(kbr, (E,), dtype=jnp.float32)
    # CondConv2d weight with k=1, groups=1, kept as (E, C_out, C_in).
    expert_w = 0.1 * jax.random.normal(kwe, (E, C_out, C_in), dtype=jnp.float32)

    y = dynamic_conv(x, routing_w, routing_b, expert_w)
    jax.block_until_ready(y)

    y_ref = dynamic_conv_reference(x, routing_w, routing_b, expert_w)
    assert y.shape == (B, C_out, H, W)
    # bf16 data path in the conv kernel -> compare with bf16-level tolerance.
    assert jnp.allclose(y, y_ref, atol=1e-2, rtol=1e-2)

    print("KERNEL_OK")
</pallas_src>

<mosaic_0001>
module attributes {stable_mosaic.version = 11 : i64} {
  func.func @_routing_mix_kernel(%arg0: memref<2x16xf32, #tpu.memory_space<vmem>>, %arg1: memref<16x8xf32, #tpu.memory_space<vmem>>, %arg2: memref<1x8xf32, #tpu.memory_space<vmem>>, %arg3: memref<8x128xf32, #tpu.memory_space<vmem>>, %arg4: memref<2x128xbf16, #tpu.memory_space<vmem>>) attributes {dimension_semantics = [], scalar_prefetch = 0 : i64, scratch_operands = 0 : i64, tpu.core_type = #tpu.core_type<tc>} {
    %c0 = arith.constant 0 : index
    %c0_0 = arith.constant 0 : index
    %0 = vector.load %arg0[%c0, %c0_0] : memref<2x16xf32, #tpu.memory_space<vmem>>, vector<2x16xf32>
    %c0_1 = arith.constant 0 : index
    %c0_2 = arith.constant 0 : index
    %1 = vector.load %arg1[%c0_1, %c0_2] : memref<16x8xf32, #tpu.memory_space<vmem>>, vector<16x8xf32>
    %cst = arith.constant dense<0.000000e+00> : vector<2x8xf32>
    %2 = tpu.matmul %0, %1, %cst {dimension_numbers = #tpu.dot_dimension_numbers<[1], [0], [0], [1], [0, 0, 1, 1], [], []>} : vector<2x16xf32>, vector<16x8xf32>, vector<2x8xf32> -> vector<2x8xf32>
    %c0_3 = arith.constant 0 : index
    %c0_4 = arith.constant 0 : index
    %3 = vector.load %arg2[%c0_3, %c0_4] : memref<1x8xf32, #tpu.memory_space<vmem>>, vector<1x8xf32>
    %4 = vector.broadcast %3 : vector<1x8xf32> to vector<2x8xf32>
    %5 = arith.addf %2, %4 : vector<2x8xf32>
    %6 = arith.negf %5 : vector<2x8xf32>
    %7 = math.exp %6 : vector<2x8xf32>
    %cst_5 = arith.constant 1.000000e+00 : f32
    %8 = vector.broadcast %cst_5 : f32 to vector<2x8xf32>
    %9 = arith.addf %8, %7 : vector<2x8xf32>
    %10 = arith.divf %8, %9 : vector<2x8xf32>
    %c0_6 = arith.constant 0 : index
    %c0_7 = arith.constant 0 : index
    %11 = vector.load %arg3[%c0_6, %c0_7] : memref<8x128xf32, #tpu.memory_space<vmem>>, vector<8x128xf32>
    %cst_8 = arith.constant dense<0.000000e+00> : vector<2x128xf32>
    %12 = tpu.matmul %10, %11, %cst_8 {dimension_numbers = #tpu.dot_dimension_numbers<[1], [0], [0], [1], [0, 0, 1, 1], [], []>} : vector<2x8xf32>, vector<8x128xf32>, vector<2x128xf32> -> vector<2x128xf32>
    %13 = arith.truncf %12 : vector<2x128xf32> to vector<2x128xbf16>
    %c0_9 = arith.constant 0 : index
    %c0_10 = arith.constant 0 : index
    %14 = vector.load %arg4[%c0_9, %c0_10] : memref<2x128xbf16, #tpu.memory_space<vmem>>, vector<2x128xbf16>
    tpu.vector_store %arg4[%c0_9, %c0_10], %13 {strides = array<i32>} : memref<2x128xbf16, #tpu.memory_space<vmem>>, vector<2x128xbf16>,
    return
  }
}

</mosaic_0001>

<llo_original>
// kernel: tpu_custom_call.1
$region0: #{tpu_custom_call.1}
  #allocation0 [shape = 'u32[]', space=smem, size = 0x4, offset = 0x4, fixed_abs, tag = 'smem constant byte address 0x4 - core index']
  #allocation1 [shape = 'u32[144,128]{1,0:T(1,128)}', space=vmem, size = 0x12000, scoped, tag = 'internal scratch']
  %s0 = inlined_call_operand.vmem [shape: f32[2,16], index: 0, kind: input, shape index: {}]
  %s1 = inlined_call_operand.vmem [shape: f32[16,8], index: 1, kind: input, shape index: {}]
  %s2 = inlined_call_operand.vmem [shape: f32[1,8], index: 2, kind: input, shape index: {}]
  %s3 = inlined_call_operand.vmem [shape: f32[8,128], index: 3, kind: input, shape index: {}]
  %s4 = inlined_call_operand.hbm [shape: bf16[2,128], index: 4, kind: output, shape index: {}]
  %s5 = sld [smem:[#allocation0]]
  $region26: #{tpu_custom_call.1} parent=0
    _
  %s7 = ssub.s32 1, %s5
  %s8 = scalar_select 0, %s7, %s5
  $region1: #{tpu_custom_call.1} parent=0
    #allocation2 [shape = 'u8[512]{0}', space=vmem, size = 0x400, scoped, tag = 'output window, operand 0, single buffered']
    #allocation3 [shape = 's32[1]{0}', space=sflag, size = 0x4, scoped, tag = 'scoped memory for tpu_custom_call.1']
    %9 = vsyncpa [#allocation3], 0
    // Predicated region
    $region2: #{tpu_custom_call.1} parent=1 // pred_check
      _
    $region3: #{tpu_custom_call.1} parent=1 // pred_check_branch
      %11 = sbr.rel (0) target = $region5
    $region4: #{tpu_custom_call.1} parent=1 // pred_region
      _
    $region5: #{tpu_custom_call.1} parent=1 // pred_fallthru
      _
    // Predicated region
    $region6: #{tpu_custom_call.1} parent=1 // pred_check
      _
    $region7: #{tpu_custom_call.1} parent=1 // pred_check_branch
      %13 = sbr.rel (0) target = $region9
    $region8: #{tpu_custom_call.1} parent=1 // pred_region
      _
    $region9: #{tpu_custom_call.1} parent=1 // pred_fallthru
      _
    // Predicated region
    $region10: #{tpu_custom_call.1} parent=1 // pred_check
      _
    $region11: #{tpu_custom_call.1} parent=1 // pred_check_branch
      %15 = sbr.rel (0) target = $region13
    $region12: #{tpu_custom_call.1} parent=1 // pred_region
      _
    $region13: #{tpu_custom_call.1} parent=1 // pred_fallthru
      _
    // Predicated region
    $region14: #{tpu_custom_call.1} parent=1 // pred_check
      _
    $region15: #{tpu_custom_call.1} parent=1 // pred_check_branch
      %17 = sbr.rel (0) target = $region17
    $region16: #{tpu_custom_call.1} parent=1 // pred_region
      _
    $region17: #{tpu_custom_call.1} parent=1 // pred_fallthru
      _
    %v18 = vld [vmem:[%s0] sm:$0x3]
    %v19 = vld [vmem:[%s1] sm:$0xff]
    %v20 = vld [vmem:[%s1 + $0x8] sm:$0xff]
    %v21 = vld [vmem:[%s2] sm:$0x1]
    %v23 = vlaneseq
    %v24 = vshrl.u32 %v23, 7
    %v25 = vsub.s32 0, %v24
    %v26 = vrot.slane %v21, %v25
    %vm28 = vcmask 130048
    %v30 = vsel %vm28, %v18, 0
    %32 = vmatprep.subr.mxu0 0.0
    %33 = vmatpush1.msra.mxu0 0.0
    %34 = vmatprep.subr.mxu0 0.0
    %35 = vmatpush1.msra.mxu0 0.0
    %36 = vmatprep.subr.mxu0 0.0
    %37 = vmatpush1.msra.mxu0 0.0
    %38 = vmatprep.subr.mxu0 0.0
    %39 = vmatpush1.msra.mxu0 0.0
    %40 = vmatprep.subr.mxu0 0.0
    %41 = vmatpush1.msra.mxu0 0.0
    %42 = vmatprep.subr.mxu0 0.0
    %43 = vmatpush1.msra.mxu0 0.0
    %44 = vmatprep.subr.mxu0 0.0
    %45 = vmatpush1.msra.mxu0 0.0
    %46 = vmatprep.subr.mxu0 0.0
    %47 = vmatpush1.msra.mxu0 0.0
    %48 = vmatprep.subr.mxu0 0.0
    %49 = vmatpush1.msra.mxu0 0.0
    %50 = vmatprep.subr.mxu0 0.0
    %51 = vmatpush1.msra.mxu0 0.0
    %52 = vmatprep.subr.mxu0 0.0
    %53 = vmatpush1.msra.mxu0 0.0
    %54 = vmatprep.subr.mxu0 0.0
    %55 = vmatpush1.msra.mxu0 0.0
    %56 = vmatprep.subr.mxu0 0.0
    %57 = vmatpush1.msra.mxu0 0.0
    %58 = vmatprep.subr.mxu0 0.0
    %59 = vmatpush1.msra.mxu0 0.0
    %60 = vmatprep.subr.mxu0 0.0
    %61 = vmatpush1.msra.mxu0 %v20
    %62 = vmatprep.subr.mxu0 0.0
    %63 = vmatpush1.msra.mxu0 %v19
    %64 = vmatprep.subr.mxu0 0.0
    %65 = vmatpush2.msra.mxu0 0.0
    %66 = vmatprep.subr.mxu0 0.0
    %67 = vmatpush2.msra.mxu0 0.0
    %68 = vmatprep.subr.mxu0 0.0
    %69 = vmatpush2.msra.mxu0 0.0
    %70 = vmatprep.subr.mxu0 0.0
    %71 = vmatpush2.msra.mxu0 0.0
    %72 = vmatprep.subr.mxu0 0.0
    %73 = vmatpush2.msra.mxu0 0.0
    %74 = vmatprep.subr.mxu0 0.0
    %75 = vmatpush2.msra.mxu0 0.0
    %76 = vmatprep.subr.mxu0 0.0
    %77 = vmatpush2.msra.mxu0 0.0
    %78 = vmatprep.subr.mxu0 0.0
    %79 = vmatpush2.msra.mxu0 0.0
    %80 = vmatprep.subr.mxu0 0.0
    %81 = vmatpush2.msra.mxu0 0.0
    %82 = vmatprep.subr.mxu0 0.0
    %83 = vmatpush2.msra.mxu0 0.0
    %84 = vmatprep.subr.mxu0 0.0
    %85 = vmatpush2.msra.mxu0 0.0
    %86 = vmatprep.subr.mxu0 0.0
    %87 = vmatpush2.msra.mxu0 0.0
    %88 = vmatprep.subr.mxu0 0.0
    %89 = vmatpush2.msra.mxu0 0.0
    %90 = vmatprep.subr.mxu0 0.0
    %91 = vmatpush2.msra.mxu0 0.0
    %92 = vmatprep.subr.mxu0 0.0
    %93 = vmatpush2.msra.mxu0 0.0
    %94 = vmatprep.subr.mxu0 0.0
    %95 = vmatpush2.msra.mxu0 0.0
    %96 = vmatprep.mubr.f32.mxu0 0.0
    %97 = vmatmul.mubr.f32.gmra.mxu0 %v30
    %v98 = vpop.f32.mrf.mxu0
    %v99 = vadd.f32 %v26, %v98
    %v100 = vpop.f32.mrf.mxu0
    %101 = vdwg.mxu0
    %v102 = vxor.u32 %v99, 2147483648
    %v103 = vmul.f32 %v102, 1.442695
    %v104 = vpow.pop %v103
    %v105 = vadd.f32 %v104, 1.0
    %v106 = vrcp.pop %v105
    %v107 = vmul.f32 1.0, %v106
    %v108 = vld [vmem:[%s3] sm:$0xff]
    %vm109 = vcmask 64512
    %v111 = vsel %vm109, %v107, 0
    %113 = vmatprep.subr.mxu0 0.0
    %114 = vmatpush1.msra.mxu0 0.0
    %115 = vmatprep.subr.mxu0 0.0
    %116 = vmatpush1.msra.mxu0 0.0
    %117 = vmatprep.subr.mxu0 0.0
    %118 = vmatpush1.msra.mxu0 0.0
    %119 = vmatprep.subr.mxu0 0.0
    %120 = vmatpush1.msra.mxu0 0.0
    %121 = vmatprep.subr.mxu0 0.0
    %122 = vmatpush1.msra.mxu0 0.0
    %123 = vmatprep.subr.mxu0 0.0
    %124 = vmatpush1.msra.mxu0 0.0
    %125 = vmatprep.subr.mxu0 0.0
    %126 = vmatpush1.msra.mxu0 0.0
    %127 = vmatprep.subr.mxu0 0.0
    %128 = vmatpush1.msra.mxu0 0.0
    %129 = vmatprep.subr.mxu0 0.0
    %130 = vmatpush1.msra.mxu0 0.0
    %131 = vmatprep.subr.mxu0 0.0
    %132 = vmatpush1.msra.mxu0 0.0
    %133 = vmatprep.subr.mxu0 0.0
    %134 = vmatpush1.msra.mxu0 0.0
    %135 = vmatprep.subr.mxu0 0.0
    %136 = vmatpush1.msra.mxu0 0.0
    %137 = vmatprep.subr.mxu0 0.0
    %138 = vmatpush1.msra.mxu0 0.0
    %139 = vmatprep.subr.mxu0 0.0
    %140 = vmatpush1.msra.mxu0 0.0
    %141 = vmatprep.subr.mxu0 0.0
    %142 = vmatpush1.msra.mxu0 0.0
    %143 = vmatprep.subr.mxu0 0.0
    %144 = vmatpush1.msra.mxu0 %v108
    %145 = vmatprep.subr.mxu0 0.0
    %146 = vmatpush2.msra.mxu0 0.0
    %147 = vmatprep.subr.mxu0 0.0
    %148 = vmatpush2.msra.mxu0 0.0
    %149 = vmatprep.subr.mxu0 0.0
    %150 = vmatpush2.msra.mxu0 0.0
    %151 = vmatprep.subr.mxu0 0.0
    %152 = vmatpush2.msra.mxu0 0.0
    %153 = vmatprep.subr.mxu0 0.0
    %154 = vmatpush2.msra.mxu0 0.0
    %155 = vmatprep.subr.mxu0 0.0
    %156 = vmatpush2.msra.mxu0 0.0
    %157 = vmatprep.subr.mxu0 0.0
    %158 = vmatpush2.msra.mxu0 0.0
    %159 = vmatprep.subr.mxu0 0.0
    %160 = vmatpush2.msra.mxu0 0.0
    %161 = vmatprep.subr.mxu0 0.0
    %162 = vmatpush2.msra.mxu0 0.0
    %163 = vmatprep.subr.mxu0 0.0
    %164 = vmatpush2.msra.mxu0 0.0
    %165 = vmatprep.subr.mxu0 0.0
    %166 = vmatpush2.msra.mxu0 0.0
    %167 = vmatprep.subr.mxu0 0.0
    %168 = vmatpush2.msra.mxu0 0.0
    %169 = vmatprep.subr.mxu0 0.0
    %170 = vmatpush2.msra.mxu0 0.0
    %171 = vmatprep.subr.mxu0 0.0
    %172 = vmatpush2.msra.mxu0 0.0
    %173 = vmatprep.subr.mxu0 0.0
    %174 = vmatpush2.msra.mxu0 0.0
    %175 = vmatprep.subr.mxu0 0.0
    %176 = vmatpush2.msra.mxu0 0.0
    %177 = vmatprep.mubr.f32.mxu0 0.0
    %178 = vmatmul.mubr.f32.gmra.mxu0 %v111
    %v179 = vpop.f32.mrf.mxu0
    %v180 = vadd.f32 0.0, %v179
    %v181 = vpop.f32.mrf.mxu0
    %182 = vdwg.mxu0
    %v183 = vpack.c.bf16 %v180, %v180
    %184 = vst [vmem:[#allocation2] sm:$0x1] %v183
    // Predicated region
    $region18: #{tpu_custom_call.1} parent=1 // pred_check
      _
    $region19: #{tpu_custom_call.1} parent=1 // pred_check_branch
      %186 = sbr.rel (0) target = $region21
    $region20: #{tpu_custom_call.1} parent=1 // pred_region
      %s188 = ssub.s32 16, 16
      %189 = vsyncadd [#allocation3], %s188
      %s191 = sshll.u32 [#allocation2], 4
      %s192 = int_to_ptr.vmem [resolvable:$true] %s191
      %194 = dma.vmem_to_hbm [thread:$0]  %s192, 16, %s4, [#allocation3]
    $region21: #{tpu_custom_call.1} parent=1 // pred_fallthru
      _
    // Predicated region
    $region22: #{tpu_custom_call.1} parent=1 // pred_check
      _
    $region23: #{tpu_custom_call.1} parent=1 // pred_check_branch
      %196 = sbr.rel (0) target = $region25
    $region24: #{tpu_custom_call.1} parent=1 // pred_region
      %197 = dma.done [#allocation3], 16
    $region25: #{tpu_custom_call.1} parent=1 // pred_fallthru
      _
    %198 = vsyncpa [#allocation3], 1

</llo_original>
